<compile_context>
chip_gen: v5e
topology: v5e:2x2
jax: 0.10.0
libtpu: 0.0.40
codegen_flags: <defaults>
</compile_context>

<pallas_src>
import math

import jax
import jax.numpy as jnp
from jax.experimental import pallas as pl
from jax.experimental.pallas import tpu as pltpu


# ---------------------------------------------------------------------------
# Kernels (pure VPU add / multiply -> HBM-roofline bound)
# ---------------------------------------------------------------------------

def _pe_add_kernel(x_ref, pe_ref, o_ref):
    # x_ref: (TB, TR, C), pe_ref: (TR, C) -> broadcast add over the batch dim.
    o_ref[...] = (x_ref[...].astype(jnp.float32)
                  + pe_ref[...].astype(jnp.float32)).astype(o_ref.dtype)


def _pe_add_dropout_kernel(x_ref, pe_ref, m_ref, o_ref):
    # m_ref holds the pre-scaled inverted-dropout multiplier (0 or 1/(1-p)).
    y = x_ref[...].astype(jnp.float32) + pe_ref[...].astype(jnp.float32)
    o_ref[...] = (y * m_ref[...].astype(jnp.float32)).astype(o_ref.dtype)


# ---------------------------------------------------------------------------
# PE table + layout / tiling helpers
# ---------------------------------------------------------------------------

def _sinusoidal_pe(S: int, D: int) -> jax.Array:
    """(S, D) float32 table, identical to the PyTorch registered buffer."""
    position = jnp.arange(S, dtype=jnp.float32)[:, None]                    # (S, 1)
    div_term = jnp.exp(jnp.arange(0, D, 2, dtype=jnp.float32)
                       * (-math.log(10000.0) / D))                          # (D/2,)
    ang = position * div_term                                               # (S, D/2)
    # interleave: even lanes = sin, odd lanes = cos
    return jnp.stack([jnp.sin(ang), jnp.cos(ang)], axis=-1).reshape(S, D)


def _choose_lane_width(F: int) -> int:
    """Largest lane width (multiple of 128) that divides F; 128 if none (pad)."""
    for c in (1024, 512, 256, 128):
        if F % c == 0:
            return c
    return 128          # caller pads F up to a multiple of 128


def _choose_tiles(B: int, R: int, C: int, itemsize: int,
                  target_block_bytes: int = 4 << 20):
    """Pick (TR, TB): ~4 MiB blocks, batch-blocked when one (R, C) slab is small.

    Per-array block <= ~4 MiB, so x/out/pe(/mask) double-buffered stay within
    the 48 MiB vmem limit set below on every TPU generation (incl. v7x 64 MiB).
    """
    sub = max(8, 32 // max(itemsize, 1))        # packed sublane tile: 8/16/32
    row_bytes = C * itemsize
    slab_bytes = R * row_bytes
    if slab_bytes <= target_block_bytes:
        TR = R                                   # full rows; block over batch
        TB = max(1, min(B, target_block_bytes // max(slab_bytes, 1)))
        while B % TB:                            # keep grid edges clean
            TB -= 1
    else:
        TB = 1
        TR = max(sub, (target_block_bytes // row_bytes // sub) * sub)
        TR = min(TR, R)
    return TR, TB


# ---------------------------------------------------------------------------
# Wrapper
# ---------------------------------------------------------------------------

def positional_encoding(x, *, dropout: float = 0.1, train: bool = False,
                        rng_key=None):
    """Sinusoidal positional encoding (+ optional inverted dropout).

    x: (batch, seq_len, d_model) floating-point array.
    """
    B, S, D = x.shape
    assert D % 2 == 0, "d_model must be even (same constraint as the PyTorch module)"
    itemsize = x.dtype.itemsize

    # PE table built once outside the kernel (mirrors the registered buffer),
    # cast to x.dtype so its HBM read / VMEM footprint matches the activations.
    pe = _sinusoidal_pe(S, D).astype(x.dtype)

    # Lane-dense 2D view of the trailing (S, D) dims: (R, C) with C % 128 == 0.
    F = S * D
    C = _choose_lane_width(F)
    Fp = ((F + C - 1) // C) * C
    pad = Fp - F
    R = Fp // C

    x2 = x.reshape(B, F)
    pe1 = pe.reshape(F)
    if pad:
        x2 = jnp.pad(x2, ((0, 0), (0, pad)))
        pe1 = jnp.pad(pe1, (0, pad))
    x3 = x2.reshape(B, R, C)
    pe2 = pe1.reshape(R, C)

    TR, TB = _choose_tiles(B, R, C, itemsize)
    grid = (pl.cdiv(R, TR), pl.cdiv(B, TB))      # batch innermost -> pe block
                                                 # index unchanged (no re-DMA)
    x_spec = pl.BlockSpec((TB, TR, C), lambda r, b: (b, r, 0))
    pe_spec = pl.BlockSpec((TR, C), lambda r, b: (r, 0))
    out_spec = pl.BlockSpec((TB, TR, C), lambda r, b: (b, r, 0))

    compiler_params = pltpu.CompilerParams(
        dimension_semantics=("parallel", "parallel"),   # batch is independent
        vmem_limit_bytes=48 * 1024 * 1024)

    if train and dropout > 0.0:
        # Dropout mask generated host/wrapper-side (portable; see header note).
        if rng_key is None:
            rng_key = jax.random.PRNGKey(0)
        keep = jax.random.bernoulli(rng_key, p=1.0 - dropout, shape=(B, F))
        m2 = (keep.astype(jnp.float32) * (1.0 / (1.0 - dropout))).astype(x.dtype)
        if pad:
            m2 = jnp.pad(m2, ((0, 0), (0, pad)))
        m3 = m2.reshape(B, R, C)

        out = pl.pallas_call(
            _pe_add_dropout_kernel,
            out_shape=jax.ShapeDtypeStruct((B, R, C), x.dtype),
            grid=grid,
            in_specs=[x_spec, pe_spec,
                      pl.BlockSpec((TB, TR, C), lambda r, b: (b, r, 0))],
            out_specs=out_spec,
            compiler_params=compiler_params,
        )(x3, pe2, m3)
    else:
        out = pl.pallas_call(
            _pe_add_kernel,
            out_shape=jax.ShapeDtypeStruct((B, R, C), x.dtype),
            grid=grid,
            in_specs=[x_spec, pe_spec],
            out_specs=out_spec,
            compiler_params=compiler_params,
        )(x3, pe2)

    out = out.reshape(B, Fp)
    if pad:
        out = out[:, :F]
    return out.reshape(B, S, D)


# ---------------------------------------------------------------------------
# Reference + test
# ---------------------------------------------------------------------------

def _reference(x):
    """Pure-JAX reference matching the PyTorch module in eval mode."""
    _, S, D = x.shape
    position = jnp.arange(S, dtype=jnp.float32)[:, None]
    div_term = jnp.exp(jnp.arange(0, D, 2, dtype=jnp.float32)
                       * (-math.log(10000.0) / D))
    pe = jnp.zeros((S, D), dtype=jnp.float32)
    pe = pe.at[:, 0::2].set(jnp.sin(position * div_term))
    pe = pe.at[:, 1::2].set(jnp.cos(position * div_term))
    return x + pe[None, :, :]


if __name__ == "__main__":
    key = jax.random.PRNGKey(0)

    # Small shape (S*D = 256 -> flattened lane-dense path, C = 128).
    B, S, D = 2, 8, 32
    x = jax.random.normal(key, (B, S, D), dtype=jnp.float32)
    out = jax.block_until_ready(positional_encoding(x, dropout=0.1, train=False))
    ref = _reference(x)
    assert out.shape == (B, S, D)
    assert jnp.allclose(out, ref, atol=1e-5, rtol=1e-5)

    # Larger shape (S*D multiple of 512 -> wider lane-dense path, batch-blocked).
    x2 = jax.random.normal(jax.random.PRNGKey(1), (4, 128, 256), dtype=jnp.float32)
    out2 = jax.block_until_ready(positional_encoding(x2, dropout=0.1, train=False))
    assert jnp.allclose(out2, _reference(x2), atol=1e-5, rtol=1e-5)

    # Odd shape (S*D = 60, not a multiple of 128 -> padded lane-dense path).
    x3 = jax.random.normal(jax.random.PRNGKey(2), (2, 6, 10), dtype=jnp.float32)
    out3 = jax.block_until_ready(positional_encoding(x3, dropout=0.1, train=False))
    assert jnp.allclose(out3, _reference(x3), atol=1e-5, rtol=1e-5)

    # Training mode: every output element is 0 (dropped) or ref/(1-p) (kept).
    out_tr = jax.block_until_ready(
        positional_encoding(x, dropout=0.1, train=True,
                            rng_key=jax.random.PRNGKey(123)))
    scaled = ref * (1.0 / 0.9)
    ok = jnp.logical_or(jnp.abs(out_tr) <= 1e-6,
                        jnp.abs(out_tr - scaled) <= 1e-4)
    assert bool(jnp.all(ok))
    assert bool(jnp.isfinite(out_tr).all())
    # Dropout should keep a nontrivial fraction and drop a nontrivial fraction.
    kept_frac = float(jnp.mean((jnp.abs(out_tr) > 1e-6).astype(jnp.float32)))
    assert 0.5 < kept_frac < 1.0

    print("KERNEL_OK")
</pallas_src>

<mosaic_0001>
module attributes {stable_mosaic.version = 11 : i64} {
  func.func @_pe_add_kernel(%arg0: i32, %arg1: i32, %arg2: memref<2x1x256xf32, #tpu.memory_space<vmem>>, %arg3: memref<1x256xf32, #tpu.memory_space<vmem>>, %arg4: memref<2x1x256xf32, #tpu.memory_space<vmem>>) attributes {dimension_semantics = [#tpu.dimension_semantics<parallel>, #tpu.dimension_semantics<parallel>], iteration_bounds = array<i64: 1, 1>, scalar_prefetch = 0 : i64, scratch_operands = 0 : i64, tpu.core_type = #tpu.core_type<tc>, window_params = [{transform_indices = @transform_0, window_bounds = array<i64: 2, 1, 256>}, {transform_indices = @transform_1, window_bounds = array<i64: 1, 256>}, {transform_indices = @transform_2, window_bounds = array<i64: 2, 1, 256>}]} {
    %c0 = arith.constant 0 : index
    %c0_0 = arith.constant 0 : index
    %c0_1 = arith.constant 0 : index
    %0 = vector.load %arg2[%c0, %c0_0, %c0_1] : memref<2x1x256xf32, #tpu.memory_space<vmem>>, vector<2x1x256xf32>
    %c0_2 = arith.constant 0 : index
    %c0_3 = arith.constant 0 : index
    %1 = vector.load %arg3[%c0_2, %c0_3] : memref<1x256xf32, #tpu.memory_space<vmem>>, vector<1x256xf32>
    %2 = vector.shape_cast %1 : vector<1x256xf32> to vector<1x1x256xf32>
    %3 = vector.broadcast %2 : vector<1x1x256xf32> to vector<2x1x256xf32>
    %4 = arith.addf %0, %3 : vector<2x1x256xf32>
    %c0_4 = arith.constant 0 : index
    %c0_5 = arith.constant 0 : index
    %c0_6 = arith.constant 0 : index
    %5 = vector.load %arg4[%c0_4, %c0_5, %c0_6] : memref<2x1x256xf32, #tpu.memory_space<vmem>>, vector<2x1x256xf32>
    tpu.vector_store %arg4[%c0_4, %c0_5, %c0_6], %4 {strides = array<i32>} : memref<2x1x256xf32, #tpu.memory_space<vmem>>, vector<2x1x256xf32>,
    return
  }
  func.func @transform_0(%arg0: i32, %arg1: i32) -> (i32, i32, i32) {
    %c0_i32 = arith.constant 0 : i32
    %c0_i32_0 = arith.constant 0 : i32
    return %arg1, %arg0, %c0_i32 : i32, i32, i32
  }
  func.func @transform_1(%arg0: i32, %arg1: i32) -> (i32, i32) {
    %c0_i32 = arith.constant 0 : i32
    %c0_i32_0 = arith.constant 0 : i32
    return %arg0, %c0_i32 : i32, i32
  }
  func.func @transform_2(%arg0: i32, %arg1: i32) -> (i32, i32, i32) {
    %c0_i32 = arith.constant 0 : i32
    %c0_i32_0 = arith.constant 0 : i32
    return %arg1, %arg0, %c0_i32 : i32, i32, i32
  }
}

</mosaic_0001>

<llo_original>
// kernel: tpu_custom_call.1
$region0: #{tpu_custom_call.1}
  #allocation0 [shape = 'u32[]', space=smem, size = 0x4, offset = 0x4, fixed_abs, tag = 'smem constant byte address 0x4 - core index']
  #allocation1 [shape = 'u32[72,128]{1,0:T(1,128)}', space=vmem, size = 0x9000, scoped, tag = 'internal scratch']
  %s0 = inlined_call_operand.hbm [shape: f32[2,1,256], index: 0, kind: input, shape index: {}]
  %s1 = inlined_call_operand.hbm [shape: f32[1,256], index: 1, kind: input, shape index: {}]
  %s2 = inlined_call_operand.hbm [shape: f32[2,1,256], index: 2, kind: output, shape index: {}]
  %s3 = sld [smem:[#allocation0]]
  $region26: #{tpu_custom_call.1} parent=0
    _
  %s5 = ssub.s32 1, %s3
  %s6 = scalar_select 0, %s5, %s3
  $region1: #{tpu_custom_call.1} parent=0
    #allocation2 [shape = 'u8[2048]{0}', space=vmem, size = 0x800, scoped, tag = 'input window, operand 0, single buffered']
    #allocation3 [shape = 's32[1]{0}', space=sflag, size = 0x4, scoped, tag = 'scoped memory for tpu_custom_call.1']
    #allocation4 [shape = 's32[1]{0}', space=sflag, size = 0x4, scoped, tag = 'scoped memory for tpu_custom_call.1']
    #allocation5 [shape = 'u8[1024]{0}', space=vmem, size = 0x400, scoped, tag = 'input window, operand 1, single buffered']
    #allocation6 [shape = 's32[1]{0}', space=sflag, size = 0x4, scoped, tag = 'scoped memory for tpu_custom_call.1']
    #allocation7 [shape = 'u8[2048]{0}', space=vmem, size = 0x800, scoped, tag = 'output window, operand 0, single buffered']
    %7 = vsyncpa [#allocation3], 0
    %8 = vsyncpa [#allocation6], 0
    %9 = vsyncpa [#allocation4], 0
    // Predicated region
    $region2: #{tpu_custom_call.1} parent=1 // pred_check
      _
    $region3: #{tpu_custom_call.1} parent=1 // pred_check_branch
      %11 = sbr.rel (0) target = $region5
    $region4: #{tpu_custom_call.1} parent=1 // pred_region
      %13 = vsyncadd [#allocation3], 0
      %s14 = sshll.u32 %s0, 4
      %s15 = int_to_ptr.hbm [resolvable:$true] %s14
      %s16 = sshll.u32 [#allocation2], 4
      %s17 = int_to_ptr.vmem [resolvable:$true] %s16
      %22 = dma.hbm_to_vmem [thread:$0]  %s15, 64, %s17, [#allocation3], 32, 32, 2
    $region5: #{tpu_custom_call.1} parent=1 // pred_fallthru
      _
    // Predicated region
    $region6: #{tpu_custom_call.1} parent=1 // pred_check
      _
    $region7: #{tpu_custom_call.1} parent=1 // pred_check_branch
      %24 = sbr.rel (0) target = $region9
    $region8: #{tpu_custom_call.1} parent=1 // pred_region
      %26 = vsyncadd [#allocation6], 0
      %s28 = sshll.u32 %s1, 4
      %s29 = int_to_ptr.hbm [resolvable:$true] %s28
      %s30 = sshll.u32 [#allocation5], 4
      %s31 = int_to_ptr.vmem [resolvable:$true] %s30
      %33 = dma.hbm_to_vmem [thread:$0]  %s29, 32, %s31, [#allocation6]
    $region9: #{tpu_custom_call.1} parent=1 // pred_fallthru
      _
    // Predicated region
    $region10: #{tpu_custom_call.1} parent=1 // pred_check
      _
    $region11: #{tpu_custom_call.1} parent=1 // pred_check_branch
      %35 = sbr.rel (0) target = $region13
    $region12: #{tpu_custom_call.1} parent=1 // pred_region
      %37 = dma.done [#allocation3], 64
    $region13: #{tpu_custom_call.1} parent=1 // pred_fallthru
      _
    // Predicated region
    $region14: #{tpu_custom_call.1} parent=1 // pred_check
      _
    $region15: #{tpu_custom_call.1} parent=1 // pred_check_branch
      %39 = sbr.rel (0) target = $region17
    $region16: #{tpu_custom_call.1} parent=1 // pred_region
      %41 = dma.done [#allocation6], 32
    $region17: #{tpu_custom_call.1} parent=1 // pred_fallthru
      _
    %v42 = vld [vmem:[#allocation2] sm:$0x3]
    %v43 = vld [vmem:[#allocation2 + $0x2] sm:$0x3]
    %v44 = vld [vmem:[#allocation5] sm:$0x3]
    %v45 = vadd.f32 %v42, %v44
    %v46 = vadd.f32 %v43, %v44
    %v47 = vlaneseq
    %vm48 = vcmp.ge.s32.totalorder %v47, 0
    %vm49 = vcmp.lt.s32.totalorder %v47, 256
    %vm50 = vmand %vm48, %vm49
    %51 = vst.msk [vmem:[#allocation7] sm:$0x3] %vm50, %v45
    %52 = vst.msk [vmem:[#allocation7 + $0x2] sm:$0x3] %vm50, %v46
    // Predicated region
    $region18: #{tpu_custom_call.1} parent=1 // pred_check
      _
    $region19: #{tpu_custom_call.1} parent=1 // pred_check_branch
      %54 = sbr.rel (0) target = $region21
    $region20: #{tpu_custom_call.1} parent=1 // pred_region
      %56 = vsyncadd [#allocation4], 0
      %s57 = sshll.u32 [#allocation7], 4
      %s58 = int_to_ptr.vmem [resolvable:$true] %s57
      %s59 = sshll.u32 %s2, 4
      %s60 = int_to_ptr.hbm [resolvable:$true] %s59
      %65 = dma.vmem_to_hbm [thread:$0]  %s58, 64, %s60, [#allocation4], 32, 32, 2
    $region21: #{tpu_custom_call.1} parent=1 // pred_fallthru
      _
    // Predicated region
    $region22: #{tpu_custom_call.1} parent=1 // pred_check
      _
    $region23: #{tpu_custom_call.1} parent=1 // pred_check_branch
      %67 = sbr.rel (0) target = $region25
    $region24: #{tpu_custom_call.1} parent=1 // pred_region
      %69 = dma.done [#allocation4], 64
    $region25: #{tpu_custom_call.1} parent=1 // pred_fallthru
      _
    %70 = vsyncpa [#allocation3], 1
    %71 = vsyncpa [#allocation6], 1
    %72 = vsyncpa [#allocation4], 1

</llo_original>
